<compile_context>
chip_gen: v7x
topology: tpu7x:2x2x1
jax: 0.10.0
libtpu: 0.0.40
codegen_flags: <defaults>
</compile_context>

<pallas_src>
import functools
import math

import jax
import jax.numpy as jnp
from jax.experimental import pallas as pl
from jax.experimental.pallas import tpu as pltpu


def _round_up(x, m):
    return ((x + m - 1) // m) * m


def _pick_tile(n_pad, cap):
    """Largest multiple of 128 that divides n_pad and is <= cap (>= 128)."""
    cap = max(cap, 128)
    m = n_pad // 128
    best = 1
    for t in range(1, m + 1):
        if m % t == 0 and 128 * t <= cap:
            best = t
    return 128 * best


def _cast(x, dtype):
    return x if x.dtype == dtype else x.astype(dtype)


def _pad_to(x, target_shape):
    pads = tuple((0, t - s) for s, t in zip(x.shape, target_shape))
    if any(hi for _, hi in pads):
        x = jnp.pad(x, pads)
    return x


# ----------------------------------------------------------------------------
# Kernels.  Grid = (B, N/TM, N/TK); k (reduction over the adj columns) is the
# innermost, "arbitrary" axis with a f32 VMEM accumulator.
# ----------------------------------------------------------------------------
def _accum_step(adj_ref, x_ref, acc_ref):
    @pl.when(pl.program_id(2) == 0)
    def _():
        acc_ref[...] = jnp.zeros_like(acc_ref)

    # (TM, TK) @ (TK, F_x_pad) on the MXU, f32 accumulation regardless of the
    # (possibly bf16) input dtype.
    acc_ref[...] += jnp.dot(adj_ref[0], x_ref[0],
                            preferred_element_type=jnp.float32)


def _finalize(alpha_ref, b_ref, out_ref, h):
    h = h + b_ref[...]                      # bias broadcasts over rows
    alpha = alpha_ref[0]                    # scalar from SMEM
    out_ref[0] = jnp.where(h > 0, h, alpha * h).astype(out_ref.dtype)


def gcn_kernel_reassoc(alpha_ref, adj_ref, x_ref, wt_ref, b_ref, out_ref,
                       acc_ref):
    """(adj @ seq) @ W^T : accumulator carries F_in_pad, weight applied once."""
    _accum_step(adj_ref, x_ref, acc_ref)

    @pl.when(pl.program_id(2) == pl.num_programs(2) - 1)
    def _():
        h = jnp.dot(acc_ref[...], wt_ref[...],
                    preferred_element_type=jnp.float32)
        _finalize(alpha_ref, b_ref, out_ref, h)


def gcn_kernel_premul(alpha_ref, adj_ref, x_ref, b_ref, out_ref, acc_ref):
    """adj @ H where H = seq @ W^T was hoisted to the wrapper (plain XLA)."""
    _accum_step(adj_ref, x_ref, acc_ref)

    @pl.when(pl.program_id(2) == pl.num_programs(2) - 1)
    def _():
        _finalize(alpha_ref, b_ref, out_ref, acc_ref[...])


# ----------------------------------------------------------------------------
# Wrapper.
# ----------------------------------------------------------------------------
def gcn_forward(seq, adj, weight, bias, alpha, *,
                mxu_dtype=jnp.float32, tile_cap=1024, vmem_limit_bytes=None):
    """seq: (B, N, F_in), adj: (B, N, N), weight: (F_out, F_in),
    bias: (F_out,), alpha: scalar -> (B, N, F_out)."""
    B, N, F_in = seq.shape
    assert adj.shape == (B, N, N)
    F_out = weight.shape[0]
    out_dtype = seq.dtype

    F_in_pad = _round_up(F_in, 128)
    F_out_pad = _round_up(F_out, 128)
    N_pad = _round_up(N, 128)

    # Pick the contraction order so the big NxN reduction carries the narrower
    # feature dim; when projecting first, do it ONCE in XLA (not per row tile).
    reassociate = F_in_pad <= F_out_pad
    if reassociate:
        x = _cast(seq, jnp.float32)
        F_x_pad = F_in_pad
    else:
        x = jnp.einsum("bnf,of->bno", _cast(seq, jnp.float32),
                       _cast(weight, jnp.float32))      # H = seq @ W^T, once
        F_x_pad = F_out_pad

    adj_p = _pad_to(_cast(adj, mxu_dtype), (B, N_pad, N_pad))
    x_p = _pad_to(_cast(x, mxu_dtype), (B, N_pad, F_x_pad))
    bias_p = _pad_to(_cast(bias, jnp.float32), (F_out_pad,)).reshape(
        1, F_out_pad)
    alpha_sm = jnp.asarray(alpha, jnp.float32).reshape(1)

    # Tile selection: largest 128-multiple divisor of N_pad <= tile_cap; cap TM
    # so a single batch still exposes >= 2 parallel row tiles (v7x megacore).
    tm_cap = tile_cap
    if B == 1 and N_pad >= 256:
        tm_cap = min(tm_cap, N_pad // 2)
    TM = _pick_tile(N_pad, tm_cap)
    TK = _pick_tile(N_pad, tile_cap)
    grid = (B, N_pad // TM, N_pad // TK)
    n_row_tiles = N_pad // TM

    itemsize = jnp.dtype(mxu_dtype).itemsize
    out_itemsize = jnp.dtype(out_dtype).itemsize

    # VMEM budget: actual footprint (double-buffered inputs/outputs + scratch),
    # 1.5x headroom, clamped to 48 MiB (safe on v7x's 64 MiB VMEM).
    if vmem_limit_bytes is None:
        vmem_use = (2 * TM * TK * itemsize            # adj tiles
                    + 2 * TK * F_x_pad * itemsize     # x tiles
                    + 2 * TM * F_out_pad * out_itemsize   # out tiles
                    + 2 * F_out_pad * 4               # bias
                    + TM * F_x_pad * 4)               # accumulator scratch
        if reassociate:
            vmem_use += 2 * F_in_pad * F_out_pad * 4  # resident weight
        vmem_limit_bytes = min(48 * 1024 * 1024,
                               max(16 * 1024 * 1024, int(1.5 * vmem_use)))

    # Advisory cost estimate with the *real* traffic (x is re-fetched once per
    # row tile; adj is streamed once; weight/bias are resident).
    flops = 2 * B * N_pad * N_pad * F_x_pad
    bytes_accessed = (B * N_pad * N_pad * itemsize
                      + B * N_pad * F_x_pad * itemsize * n_row_tiles
                      + B * N_pad * F_out_pad * out_itemsize
                      + F_out_pad * 4)
    if reassociate:
        flops += 2 * B * N_pad * F_in_pad * F_out_pad
        bytes_accessed += F_in_pad * F_out_pad * 4

    adj_spec = pl.BlockSpec((1, TM, TK), lambda b, i, k, *_: (b, i, k))
    x_spec = pl.BlockSpec((1, TK, F_x_pad), lambda b, i, k, *_: (b, k, 0))
    bias_spec = pl.BlockSpec((1, F_out_pad), lambda b, i, k, *_: (0, 0))

    if reassociate:
        wt_p = _pad_to(_cast(weight, jnp.float32).T, (F_in_pad, F_out_pad))
        wt_spec = pl.BlockSpec((F_in_pad, F_out_pad),
                               lambda b, i, k, *_: (0, 0))
        kernel = gcn_kernel_reassoc
        in_specs = [adj_spec, x_spec, wt_spec, bias_spec]
        operands = (alpha_sm, adj_p, x_p, wt_p, bias_p)
    else:
        kernel = gcn_kernel_premul
        in_specs = [adj_spec, x_spec, bias_spec]
        operands = (alpha_sm, adj_p, x_p, bias_p)

    out_p = pl.pallas_call(
        kernel,
        out_shape=jax.ShapeDtypeStruct((B, N_pad, F_out_pad), out_dtype),
        grid_spec=pltpu.PrefetchScalarGridSpec(
            num_scalar_prefetch=1,                      # alpha -> SMEM
            grid=grid,
            in_specs=in_specs,
            out_specs=pl.BlockSpec((1, TM, F_out_pad),
                                   lambda b, i, k, *_: (b, i, 0)),
            scratch_shapes=[pltpu.VMEM((TM, F_x_pad), jnp.float32)],
        ),
        compiler_params=pltpu.CompilerParams(
            dimension_semantics=("parallel", "parallel", "arbitrary"),
            vmem_limit_bytes=vmem_limit_bytes,
        ),
        cost_estimate=pl.CostEstimate(
            flops=flops, transcendentals=0, bytes_accessed=bytes_accessed),
    )(*operands)

    return out_p[:, :N, :F_out]


# ----------------------------------------------------------------------------
# Reference + self-test.
# ----------------------------------------------------------------------------
def gcn_reference(seq, adj, weight, bias, alpha):
    seq_fts = jnp.einsum("bnf,of->bno", seq, weight)
    out = jnp.einsum("bnm,bmo->bno", adj, seq_fts) + bias
    return jnp.where(out > 0, out, alpha * out)


def _run_case(key, B, N, F_in, F_out, *, mxu_dtype=jnp.float32,
              tile_cap=1024, atol=1e-4, rtol=1e-4):
    k_seq, k_adj, k_w, k_b = jax.random.split(key, 4)
    seq = jax.random.normal(k_seq, (B, N, F_in), dtype=jnp.float32)
    adj = jax.random.uniform(k_adj, (B, N, N), dtype=jnp.float32)

    # Parameters matching the PyTorch module: xavier_uniform_ Linear weight
    # (F_out, F_in), learnable bias (init 0.0, nonzero after training -> use a
    # small random value to actually exercise the add), PReLU alpha = 0.25.
    limit = math.sqrt(6.0 / (F_in + F_out))
    weight = jax.random.uniform(
        k_w, (F_out, F_in), dtype=jnp.float32, minval=-limit, maxval=limit)
    bias = 0.1 * jax.random.normal(k_b, (F_out,), dtype=jnp.float32)
    alpha = jnp.float32(0.25)

    out = jax.block_until_ready(
        gcn_forward(seq, adj, weight, bias, alpha,
                    mxu_dtype=mxu_dtype, tile_cap=tile_cap))
    ref = gcn_reference(seq, adj, weight, bias, alpha)
    assert out.shape == (B, N, F_out)
    assert jnp.allclose(out, ref, atol=atol, rtol=rtol), (
        f"mismatch: max abs err {jnp.max(jnp.abs(out - ref))}")


if __name__ == "__main__":
    key = jax.random.PRNGKey(0)
    k1, k2, k3, k4 = jax.random.split(key, 4)

    # Reassociated path (F_in <= F_out): the common GCN encoder case.
    _run_case(k1, B=2, N=16, F_in=8, F_out=32)
    # Hoisted-projection path (F_in_pad > F_out_pad): H = seq @ W^T in XLA.
    _run_case(k2, B=1, N=16, F_in=200, F_out=32)
    # Multi-tile accumulation: N not a multiple of 128, small tile cap forces
    # grid = (1, 3, 3) so the pl.when init/finalize accumulator path runs.
    _run_case(k3, B=1, N=300, F_in=8, F_out=32, tile_cap=128)
    # bf16 MXU inputs with f32 accumulation (looser tolerance by design).
    _run_case(k4, B=1, N=300, F_in=8, F_out=32, tile_cap=128,
              mxu_dtype=jnp.bfloat16, atol=2e-1, rtol=5e-2)

    print("KERNEL_OK")
</pallas_src>

<mosaic_0001>
module attributes {stable_mosaic.version = 11 : i64} {
  func.func @gcn_kernel_reassoc(%arg0: i32, %arg1: i32, %arg2: i32, %arg3: memref<1xf32, #tpu.memory_space<smem>>, %arg4: memref<1x128x128xf32, #tpu.memory_space<vmem>>, %arg5: memref<1x128x128xf32, #tpu.memory_space<vmem>>, %arg6: memref<128x128xf32, #tpu.memory_space<vmem>>, %arg7: memref<1x128xf32, #tpu.memory_space<vmem>>, %arg8: memref<1x128x128xf32, #tpu.memory_space<vmem>>, %arg9: memref<128x128xf32, #tpu.memory_space<vmem>>) attributes {dimension_semantics = [#tpu.dimension_semantics<parallel>, #tpu.dimension_semantics<parallel>, #tpu.dimension_semantics<arbitrary>], iteration_bounds = array<i64: 2, 1, 1>, scalar_prefetch = 1 : i64, scratch_operands = 1 : i64, tpu.core_type = #tpu.core_type<tc>, window_params = [{transform_indices = @transform_0, window_bounds = array<i64: 1, 128, 128>}, {transform_indices = @transform_1, window_bounds = array<i64: 1, 128, 128>}, {pipeline_mode = #tpu.pipeline_mode<synchronous>, transform_indices = @transform_2, window_bounds = array<i64: 128, 128>}, {pipeline_mode = #tpu.pipeline_mode<synchronous>, transform_indices = @transform_3, window_bounds = array<i64: 1, 128>}, {transform_indices = @transform_4, window_bounds = array<i64: 1, 128, 128>}]} {
    %c0_i32 = arith.constant 0 : i32
    %0 = arith.cmpi eq, %arg2, %c0_i32 : i32
    %1 = arith.extui %0 : i1 to i32
    %c0_i32_0 = arith.constant 0 : i32
    %2 = arith.cmpi ne, %1, %c0_i32_0 : i32
    scf.if %2 {
      %cst_12 = arith.constant 0.000000e+00 : f32
      %14 = vector.broadcast %cst_12 : f32 to vector<128x128xf32>
      %c0_13 = arith.constant 0 : index
      %c0_14 = arith.constant 0 : index
      %15 = vector.load %arg9[%c0_13, %c0_14] : memref<128x128xf32, #tpu.memory_space<vmem>>, vector<128x128xf32>
      tpu.vector_store %arg9[%c0_13, %c0_14], %14 {strides = array<i32>} : memref<128x128xf32, #tpu.memory_space<vmem>>, vector<128x128xf32>,
    } else {
    }
    %c0 = arith.constant 0 : index
    %c0_1 = arith.constant 0 : index
    %3 = vector.load %arg9[%c0, %c0_1] : memref<128x128xf32, #tpu.memory_space<vmem>>, vector<128x128xf32>
    %c0_2 = arith.constant 0 : index
    %c0_3 = arith.constant 0 : index
    %c0_4 = arith.constant 0 : index
    %4 = vector.load %arg4[%c0_2, %c0_3, %c0_4] : memref<1x128x128xf32, #tpu.memory_space<vmem>>, vector<1x128x128xf32>
    %5 = vector.shape_cast %4 : vector<1x128x128xf32> to vector<128x128xf32>
    %c0_5 = arith.constant 0 : index
    %c0_6 = arith.constant 0 : index
    %c0_7 = arith.constant 0 : index
    %6 = vector.load %arg5[%c0_5, %c0_6, %c0_7] : memref<1x128x128xf32, #tpu.memory_space<vmem>>, vector<1x128x128xf32>
    %7 = vector.shape_cast %6 : vector<1x128x128xf32> to vector<128x128xf32>
    %cst = arith.constant dense<0.000000e+00> : vector<128x128xf32>
    %8 = tpu.matmul %5, %7, %cst {dimension_numbers = #tpu.dot_dimension_numbers<[1], [0], [0], [1], [0, 0, 1, 1], [], []>} : vector<128x128xf32>, vector<128x128xf32>, vector<128x128xf32> -> vector<128x128xf32>
    %9 = arith.addf %3, %8 : vector<128x128xf32>
    %c0_8 = arith.constant 0 : index
    %c0_9 = arith.constant 0 : index
    %10 = vector.load %arg9[%c0_8, %c0_9] : memref<128x128xf32, #tpu.memory_space<vmem>>, vector<128x128xf32>
    tpu.vector_store %arg9[%c0_8, %c0_9], %9 {strides = array<i32>} : memref<128x128xf32, #tpu.memory_space<vmem>>, vector<128x128xf32>,
    %c0_i32_10 = arith.constant 0 : i32
    %11 = arith.cmpi eq, %arg2, %c0_i32_10 : i32
    %12 = arith.extui %11 : i1 to i32
    %c0_i32_11 = arith.constant 0 : i32
    %13 = arith.cmpi ne, %12, %c0_i32_11 : i32
    scf.if %13 {
      %c0_12 = arith.constant 0 : index
      %c0_13 = arith.constant 0 : index
      %14 = vector.load %arg9[%c0_12, %c0_13] : memref<128x128xf32, #tpu.memory_space<vmem>>, vector<128x128xf32>
      %c0_14 = arith.constant 0 : index
      %c0_15 = arith.constant 0 : index
      %15 = vector.load %arg6[%c0_14, %c0_15] : memref<128x128xf32, #tpu.memory_space<vmem>>, vector<128x128xf32>
      %cst_16 = arith.constant dense<0.000000e+00> : vector<128x128xf32>
      %16 = tpu.matmul %14, %15, %cst_16 {dimension_numbers = #tpu.dot_dimension_numbers<[1], [0], [0], [1], [0, 0, 1, 1], [], []>} : vector<128x128xf32>, vector<128x128xf32>, vector<128x128xf32> -> vector<128x128xf32>
      %c0_17 = arith.constant 0 : index
      %c0_18 = arith.constant 0 : index
      %17 = vector.load %arg7[%c0_17, %c0_18] : memref<1x128xf32, #tpu.memory_space<vmem>>, vector<1x128xf32>
      %18 = vector.broadcast %17 : vector<1x128xf32> to vector<128x128xf32>
      %19 = arith.addf %16, %18 : vector<128x128xf32>
      %c0_19 = arith.constant 0 : index
      %20 = memref.load %arg3[%c0_19] : memref<1xf32, #tpu.memory_space<smem>>
      %cst_20 = arith.constant 0.000000e+00 : f32
      %21 = vector.broadcast %cst_20 : f32 to vector<128x128xf32>
      %22 = arith.cmpf ogt, %19, %21 : vector<128x128xf32>
      %23 = vector.broadcast %20 : f32 to vector<128x128xf32>
      %24 = arith.mulf %23, %19 : vector<128x128xf32>
      %25 = arith.select %22, %19, %24 : vector<128x128xi1>, vector<128x128xf32>
      %c0_21 = arith.constant 0 : index
      %c0_22 = arith.constant 0 : index
      %c0_23 = arith.constant 0 : index
      %26 = vector.load %arg8[%c0_21, %c0_22, %c0_23] : memref<1x128x128xf32, #tpu.memory_space<vmem>>, vector<1x128x128xf32>
      %27 = vector.shape_cast %26 : vector<1x128x128xf32> to vector<128x128xf32>
      %28 = vector.shape_cast %25 : vector<128x128xf32> to vector<1x128x128xf32>
      tpu.vector_store %arg8[%c0_21, %c0_22, %c0_23], %28 {strides = array<i32>} : memref<1x128x128xf32, #tpu.memory_space<vmem>>, vector<1x128x128xf32>,
    } else {
    }
    return
  }
  func.func @transform_0(%arg0: i32, %arg1: i32, %arg2: i32, %arg3: memref<1xf32, #tpu.memory_space<smem>>) -> (i32, i32, i32) {
    %c0_i32 = arith.constant 0 : i32
    return %arg0, %arg1, %arg2 : i32, i32, i32
  }
  func.func @transform_1(%arg0: i32, %arg1: i32, %arg2: i32, %arg3: memref<1xf32, #tpu.memory_space<smem>>) -> (i32, i32, i32) {
    %c0_i32 = arith.constant 0 : i32
    %c0_i32_0 = arith.constant 0 : i32
    return %arg0, %arg2, %c0_i32 : i32, i32, i32
  }
  func.func @transform_2(%arg0: i32, %arg1: i32, %arg2: i32, %arg3: memref<1xf32, #tpu.memory_space<smem>>) -> (i32, i32) {
    %c0_i32 = arith.constant 0 : i32
    %c0_i32_0 = arith.constant 0 : i32
    %c0_i32_1 = arith.constant 0 : i32
    return %c0_i32, %c0_i32_0 : i32, i32
  }
  func.func @transform_3(%arg0: i32, %arg1: i32, %arg2: i32, %arg3: memref<1xf32, #tpu.memory_space<smem>>) -> (i32, i32) {
    %c0_i32 = arith.constant 0 : i32
    %c0_i32_0 = arith.constant 0 : i32
    %c0_i32_1 = arith.constant 0 : i32
    return %c0_i32, %c0_i32_0 : i32, i32
  }
  func.func @transform_4(%arg0: i32, %arg1: i32, %arg2: i32, %arg3: memref<1xf32, #tpu.memory_space<smem>>) -> (i32, i32, i32) {
    %c0_i32 = arith.constant 0 : i32
    %c0_i32_0 = arith.constant 0 : i32
    return %arg0, %arg1, %c0_i32 : i32, i32, i32
  }
}

</mosaic_0001>

<llo_original>
// kernel: tpu_custom_call.1
$region0: #{tpu_custom_call.1}
  #allocation0 [shape = 'u32[]', space=smem, size = 0x4, offset = 0x4, fixed_abs, tag = 'smem constant byte address 0x4 - core index']
  #allocation1 [shape = 'u32[144,128]{1,0:T(1,128)}', space=vmem, size = 0x12000, scoped, tag = 'internal scratch']
  #allocation2 [shape = 'f32[128,128]{1,0:T(8,128)}', space=vmem, size = 0x10000, scoped, tag = 'scratch operand']
  #allocation3 [shape = 's32[1]{0}', space=sflag, size = 0x4, scoped, tag = 'scoped memory for tpu_custom_call.1']
  #allocation4 [shape = 'f32[1]{0:T(128)S(6)}', space=smem, size = 0x200, scoped, tag = 'prefetched SMEM operand 0']
  %s0 = inlined_call_operand.<no memory space> [shape: f32[1], index: 0, kind: input, shape index: {}]
  %s1 = inlined_call_operand.hbm [shape: f32[2,128,128], index: 1, kind: input, shape index: {}]
  %s2 = inlined_call_operand.hbm [shape: f32[2,128,128], index: 2, kind: input, shape index: {}]
  %s3 = inlined_call_operand.hbm [shape: f32[128,128], index: 3, kind: input, shape index: {}]
  %s4 = inlined_call_operand.vmem [shape: f32[1,128], index: 4, kind: input, shape index: {}]
  %s5 = inlined_call_operand.hbm [shape: f32[2,128,128], index: 5, kind: output, shape index: {}]
  %s6 = sld [smem:[#allocation0]]
  $region69: #{tpu_custom_call.1} parent=0
    _
  %s8 = ssub.s32 1, %s6
  %s9 = scalar_select 0, %s8, %s6
  %10 = sst [smem:[#allocation4]] %s0
  $region1: #{tpu_custom_call.1} parent=0
    #allocation5 [shape = 'u8[131072]{0}', space=vmem, size = 0x20000, scoped, tag = 'input window, operand 1']
    #allocation6 [shape = 's32[2]{0}', space=sflag, size = 0x8, scoped, tag = 'scoped memory for tpu_custom_call.1']
    #allocation7 [shape = 's32[2]{0}', space=sflag, size = 0x8, scoped, tag = 'scoped memory for tpu_custom_call.1']
    #allocation8 [shape = 'u8[131072]{0}', space=vmem, size = 0x20000, scoped, tag = 'input window, operand 2']
    #allocation9 [shape = 's32[2]{0}', space=sflag, size = 0x8, scoped, tag = 'scoped memory for tpu_custom_call.1']
    #allocation10 [shape = 'u8[65536]{0}', space=vmem, size = 0x10000, scoped, tag = 'input window, operand 3, single buffered']
    #allocation11 [shape = 'u8[131072]{0}', space=vmem, size = 0x20000, scoped, tag = 'output window, operand 0']
    %11 = vsyncpa [#allocation6], 0
    %s12 = scalar_lea.sflag [#allocation6], 1
    %13 = vsyncpa %s12, 0
    %14 = vsyncpa [#allocation9], 0
    %s15 = scalar_lea.sflag [#allocation9], 1
    %16 = vsyncpa %s15, 0
    %17 = vsyncpa [#allocation7], 0
    %s18 = scalar_lea.sflag [#allocation7], 1
    %19 = vsyncpa %s18, 0
    loop: start=0, step=1, limit=4
    $region2: #{tpu_custom_call.1} parent=1 // loop_pre_header
      _
    $region3: #{tpu_custom_call.1} parent=1 // loop_header
      %s21 = sphi 0, %s25
      %p22 = scmp.ge.s32.totalorder %s21, 4
      %s28 = sphi 0, %s47
      %s29 = sphi 0, %s43
      %s30 = sphi 0, %s39
      %s31 = sphi 0, %s28
      %s32 = sphi 0, %s29
      %s33 = sphi 0, %s30
      %s34 = sphi 0, %s31
      %s35 = sphi 0, %s32
      %s36 = sphi 0, %s33
      %s54 = sphi 0, %s56
      %s57 = sphi 0, %s54
      %s58 = sphi 0, %s57
      %s74 = sphi 0, %s58
      %s82 = sphi 0, %s84
      %s85 = sphi 0, %s82
      %s86 = sphi 0, %s85
      %s102 = sphi 0, %s86
      %s106 = sphi 0, %s106
      %s108 = sphi 0, %s106
      %s109 = sphi 0, %s108
      %s123 = sphi 0, %s109
      %s127 = sphi 0, %s127
      %s129 = sphi 0, %s127
      %s130 = sphi 0, %s129
      %s144 = sphi 0, %s130
      %s152 = sphi 0, %s154
      %s155 = sphi 0, %s152
      %s156 = sphi 0, %s155
      %s172 = sphi 0, %s156
    $region4: #{tpu_custom_call.1} parent=1 // loop_header_branch
      %24 = sbr.rel (%p22) target = $region8
    $region5: #{tpu_custom_call.1} parent=1 // loop_body
      %s26 = ssub.s32 %s21, 1
      %s27 = ssub.s32 %s21, 2
      %s37 = sadd.s32 1, %s30
      %p38 = scmp.ge.s32.totalorder %s37, 1
      %s39 = scalar_select %p38, 0, %s37
      %s40 = sadd.s32 1, %s29
      %s41 = scalar_select %p38, %s40, %s29
      %p42 = scmp.ge.s32.totalorder %s41, 1
      %s43 = scalar_select %p42, 0, %s41
      %s44 = sadd.s32 1, %s28
      %s45 = scalar_select %p42, %s44, %s28
      %p46 = scmp.ge.s32.totalorder %s45, 2
      %s47 = scalar_select %p46, 0, %s45
      %s48 = ssub.s32 %s28, %s47
      %s49 = ssub.s32 %s29, %s43
      %s50 = sor.u32 %s48, %s49
      %s51 = ssub.s32 %s30, %s39
      %s52 = sor.u32 %s50, %s51
      %p53 = scmp.eq.s32.totalorder %s52, 0
      %s55 = sadd.s32 %s54, 1
      %s56 = scalar_select %p53, %s54, %s55
      %p59 = pneg %p53
      %p60 = scmp.eq.s32.totalorder %s21, 1
      %p61 = por %p59, %p60
      %p62 = scmp.ne.s32.totalorder %s54, %s57
      %p63 = scmp.eq.s32.totalorder %s21, 0
      %p64 = por %p62, %p63
      %p65 = scmp.ne.s32.totalorder %s54, %s57
      %p66 = scmp.eq.s32.totalorder %s26, 1
      %p67 = por %p65, %p66
      %p68 = scmp.ne.s32.totalorder %s57, %s58
      %p69 = scmp.eq.s32.totalorder %s26, 0
      %p70 = por %p68, %p69
      %p71 = scmp.ne.s32.totalorder %s57, %s58
      %p72 = scmp.eq.s32.totalorder %s27, 1
      %p73 = por %p71, %p72
      %p75 = scmp.ne.s32.totalorder %s58, %s74
      %p76 = scmp.eq.s32.totalorder %s27, 0
      %p77 = por %p75, %p76
      %s78 = ssub.s32 %s28, %s47
      %s79 = ssub.s32 %s30, %s39
      %s80 = sor.u32 %s78, %s79
      %p81 = scmp.eq.s32.totalorder %s80, 0
      %s83 = sadd.s32 %s82, 1
      %s84 = scalar_select %p81, %s82, %s83
      %p87 = pneg %p81
      %p88 = scmp.eq.s32.totalorder %s21, 1
      %p89 = por %p87, %p88
      %p90 = scmp.ne.s32.totalorder %s82, %s85
      %p91 = scmp.eq.s32.totalorder %s21, 0
      %p92 = por %p90, %p91
      %p93 = scmp.ne.s32.totalorder %s82, %s85
      %p94 = scmp.eq.s32.totalorder %s26, 1
      %p95 = por %p93, %p94
      %p96 = scmp.ne.s32.totalorder %s85, %s86
      %p97 = scmp.eq.s32.totalorder %s26, 0
      %p98 = por %p96, %p97
      %p99 = scmp.ne.s32.totalorder %s85, %s86
      %p100 = scmp.eq.s32.totalorder %s27, 1
      %p101 = por %p99, %p100
      %p103 = scmp.ne.s32.totalorder %s86, %s102
      %p104 = scmp.eq.s32.totalorder %s27, 0
      %p105 = por %p103, %p104
      %s107 = sadd.s32 %s106, 1
      %p110 = scmp.eq.s32.totalorder %s21, 1
      %p111 = scmp.ne.s32.totalorder %s106, %s108
      %p112 = scmp.eq.s32.totalorder %s21, 0
      %p113 = por %p111, %p112
      %p114 = scmp.ne.s32.totalorder %s106, %s108
      %p115 = scmp.eq.s32.totalorder %s26, 1
      %p116 = por %p114, %p115
      %p117 = scmp.ne.s32.totalorder %s108, %s109
      %p118 = scmp.eq.s32.totalorder %s26, 0
      %p119 = por %p117, %p118
      %p120 = scmp.ne.s32.totalorder %s108, %s109
      %p121 = scmp.eq.s32.totalorder %s27, 1
      %p122 = por %p120, %p121
      %p124 = scmp.ne.s32.totalorder %s109, %s123
      %p125 = scmp.eq.s32.totalorder %s27, 0
      %p126 = por %p124, %p125
      %s128 = sadd.s32 %s127, 1
      %p131 = scmp.eq.s32.totalorder %s21, 1
      %p132 = scmp.ne.s32.totalorder %s127, %s129
      %p133 = scmp.eq.s32.totalorder %s21, 0
      %p134 = por %p132, %p133
      %p135 = scmp.ne.s32.totalorder %s127, %s129
      %p136 = scmp.eq.s32.totalorder %s26, 1
      %p137 = por %p135, %p136
      %p138 = scmp.ne.s32.totalorder %s129, %s130
      %p139 = scmp.eq.s32.totalorder %s26, 0
      %p140 = por %p138, %p139
      %p141 = scmp.ne.s32.totalorder %s129, %s130
      %p142 = scmp.eq.s32.totalorder %s27, 1
      %p143 = por %p141, %p142
      %p145 = scmp.ne.s32.totalorder %s130, %s144
      %p146 = scmp.eq.s32.totalorder %s27, 0
      %p147 = por %p145, %p146
      %s148 = ssub.s32 %s28, %s47
      %s149 = ssub.s32 %s29, %s43
      %s150 = sor.u32 %s148, %s149
      %p151 = scmp.eq.s32.totalorder %s150, 0
      %s153 = sadd.s32 %s152, 1
      %s154 = scalar_select %p151, %s152, %s153
      %p157 = pneg %p151
      %p158 = scmp.eq.s32.totalorder %s21, 1
      %p159 = por %p157, %p158
      %p160 = scmp.ne.s32.totalorder %s152, %s155
      %p161 = scmp.eq.s32.totalorder %s21, 0
      %p162 = por %p160, %p161
      %p163 = scmp.ne.s32.totalorder %s152, %s155
      %p164 = scmp.eq.s32.totalorder %s26, 1
      %p165 = por %p163, %p164
      %p166 = scmp.ne.s32.totalorder %s155, %s156
      %p167 = scmp.eq.s32.totalorder %s26, 0
      %p168 = por %p166, %p167
      %p169 = scmp.ne.s32.totalorder %s155, %s156
      %p170 = scmp.eq.s32.totalorder %s27, 1
      %p171 = por %p169, %p170
      %p173 = scmp.ne.s32.totalorder %s156, %s172
      %p174 = scmp.eq.s32.totalorder %s27, 0
      %p175 = por %p173, %p174
      %p176 = scmp.le.s32.totalorder 1, %s21
      %p177 = scmp.lt.s32.totalorder %s21, 3
      %p178 = pnand %p176, %p177
      %p179 = pneg %p178
      // Predicated region
      $region9: #{tpu_custom_call.1} parent=5 // pred_check
        _
      $region10: #{tpu_custom_call.1} parent=5 // pred_check_branch
        %181 = sbr.rel (%p178) target = $region12
      $region11: #{tpu_custom_call.1} parent=5 // pred_region
        %s182 = ssub.s32 %s21, 1
        // Predicated region
        $region13: #{tpu_custom_call.1} parent=11 // pred_check
          %p183 = pneg %p119
        $region14: #{tpu_custom_call.1} parent=11 // pred_check_branch
          %185 = sbr.rel (%p183) target = $region16
        $region15: #{tpu_custom_call.1} parent=11 // pred_region
          %s187 = ssub.s32 2048, 2048
          %188 = vsyncadd [#allocation9], %s187
          %s189 = sshll.u32 [#allocation10], 4
          %s190 = int_to_ptr.vmem [resolvable:$true] %s189
          %195 = dma.hbm_to_vmem [thread:$0]  %s3, 2048, %s190, [#allocation9], 128, 128, 8
        $region16: #{tpu_custom_call.1} parent=11 // pred_fallthru
          _
        // Predicated region
        $region17: #{tpu_custom_call.1} parent=11 // pred_check
          %p196 = pneg %p140
        $region18: #{tpu_custom_call.1} parent=11 // pred_check_branch
          %198 = sbr.rel (%p196) target = $region20
        $region19: #{tpu_custom_call.1} parent=11 // pred_region
          _
        $region20: #{tpu_custom_call.1} parent=11 // pred_fallthru
          _
      $region12: #{tpu_custom_call.1} parent=5 // pred_fallthru
        _
      %p199 = scmp.lt.s32.totalorder %s21, 2
      // Predicated region
      $region21: #{tpu_custom_call.1} parent=5 // pred_check
        %p200 = pneg %p199
      $region22: #{tpu_custom_call.1} parent=5 // pred_check_branch
        %202 = sbr.rel (%p200) target = $region24
      $region23: #{tpu_custom_call.1} parent=5 // pred_region
        // Predicated region
        $region25: #{tpu_custom_call.1} parent=23 // pred_check
          %p203 = pneg %p64
        $region26: #{tpu_custom_call.1} parent=23 // pred_check_branch
          %205 = sbr.rel (%p203) target = $region28
        $region27: #{tpu_custom_call.1} parent=23 // pred_region
          %s206 = sand.u32 %s54, 1
          %s207 = scalar_lea.sflag [#allocation6], %s206
          %s208 = sand.u32 %s54, 1
          %s209 = smul.addr %s208, 128
          %s210 = scalar_lea.vmem [#allocation5], %s209
          %s211 = smul.u32 16, %s29
          %s213 = ssub.s32 2048, 2048
          %214 = vsyncadd %s207, %s213
          %s215 = sadd.s32 %s30, %s211
          %s216 = smul.addr %s28, 16
          %s217 = sadd.s32 %s215, %s216
          %s218 = smul.addr %s217, 128
          %s219 = scalar_lea.hbm %s1, %s218
          %s220 = sshll.u32 %s210, 4
          %s221 = int_to_ptr.vmem [resolvable:$true] %s220
          %226 = dma.hbm_to_vmem [thread:$0]  %s219, 2048, %s221, %s207, 128, 128, 8
        $region28: #{tpu_custom_call.1} parent=23 // pred_fallthru
          _
        // Predicated region
        $region29: #{tpu_custom_call.1} parent=23 // pred_check
          %p227 = pneg %p92
        $region30: #{tpu_custom_call.1} parent=23 // pred_check_branch
          %229 = sbr.rel (%p227) target = $region32
        $region31: #{tpu_custom_call.1} parent=23 // pred_region
          %s230 = sand.u32 %s21, 1
          %s231 = scalar_lea.sflag [#allocation9], %s230
          %s232 = sand.u32 %s82, 1
          %s233 = smul.addr %s232, 128
          %s234 = scalar_lea.vmem [#allocation8], %s233
          %s235 = smul.u32 16, %s30
          %s237 = ssub.s32 2048, 2048
          %238 = vsyncadd %s231, %s237
          %s239 = smul.addr %s28, 16
          %s240 = sadd.s32 %s235, %s239
          %s241 = smul.addr %s240, 128
          %s242 = scalar_lea.hbm %s2, %s241
          %s243 = sshll.u32 %s234, 4
          %s244 = int_to_ptr.vmem [resolvable:$true] %s243
          %249 = dma.hbm_to_vmem [thread:$0]  %s242, 2048, %s244, %s231, 128, 128, 8
        $region32: #{tpu_custom_call.1} parent=23 // pred_fallthru
          _
      $region24: #{tpu_custom_call.1} parent=5 // pred_fallthru
        _
      %p250 = scmp.le.s32.totalorder 1, %s21
      %p251 = scmp.lt.s32.totalorder %s21, 3
      %p252 = pnand %p250, %p251
      %p253 = pneg %p252
      // Predicated region
      $region33: #{tpu_custom_call.1} parent=5 // pred_check
        _
      $region34: #{tpu_custom_call.1} parent=5 // pred_check_branch
        %255 = sbr.rel (%p252) target = $region36
      $region35: #{tpu_custom_call.1} parent=5 // pred_region
        %s256 = ssub.s32 %s21, 1
        %s257 = sand.u32 %s57, 1
        %s258 = scalar_lea.sflag [#allocation6], %s257
        %s259 = sand.u32 %s57, 1
        %s260 = smul.addr %s259, 128
        %s261 = scalar_lea.vmem [#allocation5], %s260
        // Predicated region
        $region37: #{tpu_custom_call.1} parent=35 // pred_check
          %p262 = pneg %p70
        $region38: #{tpu_custom_call.1} parent=35 // pred_check_branch
          %264 = sbr.rel (%p262) target = $region40
        $region39: #{tpu_custom_call.1} parent=35 // pred_region
          %265 = dma.done %s258, 2048
        $region40: #{tpu_custom_call.1} parent=35 // pred_fallthru
          _
        %s266 = sand.u32 %s26, 1
        %s267 = scalar_lea.sflag [#allocation9], %s266
        %s268 = sand.u32 %s85, 1
        %s269 = smul.addr %s268, 128
        %s270 = scalar_lea.vmem [#allocation8], %s269
        // Predicated region
        $region41: #{tpu_custom_call.1} parent=35 // pred_check
          %p271 = pneg %p98
        $region42: #{tpu_custom_call.1} parent=35 // pred_check_branch
          %273 = sbr.rel (%p271) target = $region44
        $region43: #{tpu_custom_call.1} parent=35 // pred_region
          %274 = dma.done %s267, 2048
        $region44: #{tpu_custom_call.1} parent=35 // pred_fallthru
          _
        // Predicated region
        $region45: #{tpu_custom_call.1} parent=35 // pred_check
          %p275 = pneg %p119
        $region46: #{tpu_custom_call.1} parent=35 // pred_check_branch
          %277 = sbr.rel (%p275) target = $region48
        $region47: #{tpu_custom_call.1} parent=35 // pred_region
          %278 = dma.done [#allocation9], 2048
        $region48: #{tpu_custom_call.1} parent=35 // pred_fallthru
          _
        %s279 = sand.u32 %s57, 1
        %s280 = scalar_lea.sflag [#allocation6], %s279
        %s281 = sand.u32 %s57, 1
        %s282 = smul.addr %s281, 128
        %s283 = scalar_lea.vmem [#allocation5], %s282
        %p284 = pneg %p70
        %p285 = pneg %p67
        %s286 = sand.u32 %s26, 1
        %s287 = scalar_lea.sflag [#allocation9], %s286
        %s288 = sand.u32 %s85, 1
        %s289 = smul.addr %s288, 128
        %s290 = scalar_lea.vmem [#allocation8], %s289
        %p291 = pneg %p98
        %p292 = pneg %p95
        %p293 = pneg %p119
        %p294 = pneg %p116
        %p295 = pneg %p140
        %p296 = pneg %p137
        %p297 = pneg %p168
        %p298 = pneg %p165
        %s299 = sand.u32 %s155, 1
        %s300 = scalar_lea.sflag [#allocation7], %s299
        %s301 = sand.u32 %s155, 1
        %s302 = smul.addr %s301, 128
        %s303 = scalar_lea.vmem [#allocation11], %s302
        %s304 = smul.u32 16, %s32
        %s305 = smul.u32 16, %s33
        %s306 = smul.u32 16, %s32
        %p307 = scmp.eq.s32.totalorder %s33, 0
        // Predicated region
        $region49: #{tpu_custom_call.1} parent=35 // pred_check
          %p308 = pneg %p307
        $region50: #{tpu_custom_call.1} parent=35 // pred_check_branch
          %310 = sbr.rel (%p308) target = $region52
        $region51: #{tpu_custom_call.1} parent=35 // pred_region
          %311 = vst [vmem:[#allocation2] sm:$0xff] 0.0
          %312 = vst [vmem:[#allocation2 + $0x8] sm:$0xff] 0.0
          %313 = vst [vmem:[#allocation2 + $0x10] sm:$0xff] 0.0
          %314 = vst [vmem:[#allocation2 + $0x18] sm:$0xff] 0.0
          %315 = vst [vmem:[#allocation2 + $0x20] sm:$0xff] 0.0
          %316 = vst [vmem:[#allocation2 + $0x28] sm:$0xff] 0.0
          %317 = vst [vmem:[#allocation2 + $0x30] sm:$0xff] 0.0
          %318 = vst [vmem:[#allocation2 + $0x38] sm:$0xff] 0.0
          %319 = vst [vmem:[#allocation2 + $0x40] sm:$0xff] 0.0
          %320 = vst [vmem:[#allocation2 + $0x48] sm:$0xff] 0.0
          %321 = vst [vmem:[#allocation2 + $0x50] sm:$0xff] 0.0
          %322 = vst [vmem:[#allocation2 + $0x58] sm:$0xff] 0.0
          %323 = vst [vmem:[#allocation2 + $0x60] sm:$0xff] 0.0
          %324 = vst [vmem:[#allocation2 + $0x68] sm:$0xff] 0.0
          %325 = vst [vmem:[#allocation2 + $0x70] sm:$0xff] 0.0
          %326 = vst [vmem:[#allocation2 + $0x78] sm:$0xff] 0.0
        $region52: #{tpu_custom_call.1} parent=35 // pred_fallthru
          _
        %v327 = vld [vmem:[#allocation2] sm:$0xff]
        %v328 = vld [vmem:[#allocation2 + $0x8] sm:$0xff]
        %v329 = vld [vmem:[#allocation2 + $0x10] sm:$0xff]
        %v330 = vld [vmem:[#allocation2 + $0x18] sm:$0xff]
        %v331 = vld [vmem:[#allocation2 + $0x20] sm:$0xff]
        %v332 = vld [vmem:[#allocation2 + $0x28] sm:$0xff]
        %v333 = vld [vmem:[#allocation2 + $0x30] sm:$0xff]
        %v334 = vld [vmem:[#allocation2 + $0x38] sm:$0xff]
        %v335 = vld [vmem:[#allocation2 + $0x40] sm:$0xff]
        %v336 = vld [vmem:[#allocation2 + $0x48] sm:$0xff]
        %v337 = vld [vmem:[#allocation2 + $0x50] sm:$0xff]
        %v338 = vld [vmem:[#allocation2 + $0x58] sm:$0xff]
        %v339 = vld [vmem:[#allocation2 + $0x60] sm:$0xff]
        %v340 = vld [vmem:[#allocation2 + $0x68] sm:$0xff]
        %v341 = vld [vmem:[#allocation2 + $0x70] sm:$0xff]
        %v342 = vld [vmem:[#allocation2 + $0x78] sm:$0xff]
        %v343 = vld [vmem:[%s261] sm:$0xff]
        %v344 = vld [vmem:[%s261 + $0x8] sm:$0xff]
        %v345 = vld [vmem:[%s261 + $0x10] sm:$0xff]
        %v346 = vld [vmem:[%s261 + $0x18] sm:$0xff]
        %v347 = vld [vmem:[%s261 + $0x20] sm:$0xff]
        %v348 = vld [vmem:[%s261 + $0x28] sm:$0xff]
        %v349 = vld [vmem:[%s261 + $0x30] sm:$0xff]
        %v350 = vld [vmem:[%s261 + $0x38] sm:$0xff]
        %v351 = vld [vmem:[%s261 + $0x40] sm:$0xff]
        %v352 = vld [vmem:[%s261 + $0x48] sm:$0xff]
        %v353 = vld [vmem:[%s261 + $0x50] sm:$0xff]
        %v354 = vld [vmem:[%s261 + $0x58] sm:$0xff]
        %v355 = vld [vmem:[%s261 + $0x60] sm:$0xff]
        %v356 = vld [vmem:[%s261 + $0x68] sm:$0xff]
        %v357 = vld [vmem:[%s261 + $0x70] sm:$0xff]
        %v358 = vld [vmem:[%s261 + $0x78] sm:$0xff]
        %v359 = vld [vmem:[%s270] sm:$0xff]
        %v360 = vld [vmem:[%s270 + $0x8] sm:$0xff]
        %v361 = vld [vmem:[%s270 + $0x10] sm:$0xff]
        %v362 = vld [vmem:[%s270 + $0x18] sm:$0xff]
        %v363 = vld [vmem:[%s270 + $0x20] sm:$0xff]
        %v364 = vld [vmem:[%s270 + $0x28] sm:$0xff]
        %v365 = vld [vmem:[%s270 + $0x30] sm:$0xff]
        %v366 = vld [vmem:[%s270 + $0x38] sm:$0xff]
        %v367 = vld [vmem:[%s270 + $0x40] sm:$0xff]
        %v368 = vld [vmem:[%s270 + $0x48] sm:$0xff]
        %v369 = vld [vmem:[%s270 + $0x50] sm:$0xff]
        %v370 = vld [vmem:[%s270 + $0x58] sm:$0xff]
        %v371 = vld [vmem:[%s270 + $0x60] sm:$0xff]
        %v372 = vld [vmem:[%s270 + $0x68] sm:$0xff]
        %v373 = vld [vmem:[%s270 + $0x70] sm:$0xff]
        %v374 = vld [vmem:[%s270 + $0x78] sm:$0xff]
        %375 = vmatprep.subr.mxu0 0.0
        %376 = vmatpush1.msra.mxu0 %v359
        %377 = vmatprep.subr.mxu0 0.0
        %378 = vmatpush1.msra.mxu0 %v360
        %379 = vmatprep.subr.mxu0 0.0
        %380 = vmatpush1.msra.mxu0 %v361
        %381 = vmatprep.subr.mxu0 0.0
        %382 = vmatpush1.msra.mxu0 %v362
        %383 = vmatprep.subr.mxu0 0.0
        %384 = vmatpush1.msra.mxu0 %v363
        %385 = vmatprep.subr.mxu0 0.0
        %386 = vmatpush1.msra.mxu0 %v364
        %387 = vmatprep.subr.mxu0 0.0
        %388 = vmatpush1.msra.mxu0 %v365
        %389 = vmatprep.subr.mxu0 0.0
        %390 = vmatpush1.msra.mxu0 %v366
        %391 = vmatprep.subr.mxu0 0.0
        %392 = vmatpush1.msra.mxu0 %v367
        %393 = vmatprep.subr.mxu0 0.0
        %394 = vmatpush1.msra.mxu0 %v368
        %395 = vmatprep.subr.mxu0 0.0
        %396 = vmatpush1.msra.mxu0 %v369
        %397 = vmatprep.subr.mxu0 0.0
        %398 = vmatpush1.msra.mxu0 %v370
        %399 = vmatprep.subr.mxu0 0.0
        %400 = vmatpush1.msra.mxu0 %v371
        %401 = vmatprep.subr.mxu0 0.0
        %402 = vmatpush1.msra.mxu0 %v372
        %403 = vmatprep.subr.mxu0 0.0
        %404 = vmatpush1.msra.mxu0 %v373
        %405 = vmatprep.subr.mxu0 0.0
        %406 = vmatpush1.msra.mxu0 %v374
        %407 = vmatprep.subr.mxu0 0.0
        %408 = vmatpush1.msra.mxu0 0.0
        %409 = vmatprep.subr.mxu0 0.0
        %410 = vmatpush1.msra.mxu0 0.0
        %411 = vmatprep.subr.mxu0 0.0
        %412 = vmatpush1.msra.mxu0 0.0
        %413 = vmatprep.subr.mxu0 0.0
        %414 = vmatpush1.msra.mxu0 0.0
        %415 = vmatprep.subr.mxu0 0.0
        %416 = vmatpush1.msra.mxu0 0.0
        %417 = vmatprep.subr.mxu0 0.0
        %418 = vmatpush1.msra.mxu0 0.0
        %419 = vmatprep.subr.mxu0 0.0
        %420 = vmatpush1.msra.mxu0 0.0
        %421 = vmatprep.subr.mxu0 0.0
        %422 = vmatpush1.msra.mxu0 0.0
        %423 = vmatprep.subr.mxu0 0.0
        %424 = vmatpush1.msra.mxu0 0.0
        %425 = vmatprep.subr.mxu0 0.0
        %426 = vmatpush1.msra.mxu0 0.0
        %427 = vmatprep.subr.mxu0 0.0
        %428 = vmatpush1.msra.mxu0 0.0
        %429 = vmatprep.subr.mxu0 0.0
        %430 = vmatpush1.msra.mxu0 0.0
        %431 = vmatprep.subr.mxu0 0.0
        %432 = vmatpush1.msra.mxu0 0.0
        %433 = vmatprep.subr.mxu0 0.0
        %434 = vmatpush1.msra.mxu0 0.0
        %435 = vmatprep.subr.mxu0 0.0
        %436 = vmatpush1.msra.mxu0 0.0
        %437 = vmatprep.subr.mxu0 0.0
        %438 = vmatpush1.msra.mxu0 0.0
        %439 = vmatprep.mubr.f32.mxu0 0.0
        %440 = vmatmul.mubr.f32.gmra.mrb[0].mxu0 %v343
        %v441 = vpop.f32.mrb[0].mxu0
        %v442 = vadd.f32 0.0, %v441
        %v443 = vpop.f32.mrb[0].mxu0
        %444 = vmatprep.mubr.f32.mxu0 0.0
        %445 = vmatmul.mubr.f32.gmra.mrb[0].mxu0 %v344
        %v446 = vpop.f32.mrb[0].mxu0
        %v447 = vadd.f32 0.0, %v446
        %v448 = vpop.f32.mrb[0].mxu0
        %449 = vmatprep.mubr.f32.mxu0 0.0
        %450 = vmatmul.mubr.f32.gmra.mrb[0].mxu0 %v345
        %v451 = vpop.f32.mrb[0].mxu0
        %v452 = vadd.f32 0.0, %v451
        %v453 = vpop.f32.mrb[0].mxu0
        %454 = vmatprep.mubr.f32.mxu0 0.0
        %455 = vmatmul.mubr.f32.gmra.mrb[0].mxu0 %v346
        %v456 = vpop.f32.mrb[0].mxu0
        %v457 = vadd.f32 0.0, %v456
        %v458 = vpop.f32.mrb[0].mxu0
        %459 = vmatprep.mubr.f32.mxu0 0.0
        %460 = vmatmul.mubr.f32.gmra.mrb[0].mxu0 %v347
        %v461 = vpop.f32.mrb[0].mxu0
        %v462 = vadd.f32 0.0, %v461
        %v463 = vpop.f32.mrb[0].mxu0
        %464 = vmatprep.mubr.f32.mxu0 0.0
        %465 = vmatmul.mubr.f32.gmra.mrb[0].mxu0 %v348
        %v466 = vpop.f32.mrb[0].mxu0
        %v467 = vadd.f32 0.0, %v466
        %v468 = vpop.f32.mrb[0].mxu0
        %469 = vmatprep.mubr.f32.mxu0 0.0
        %470 = vmatmul.mubr.f32.gmra.mrb[0].mxu0 %v349
        %v471 = vpop.f32.mrb[0].mxu0
        %v472 = vadd.f32 0.0, %v471
        %v473 = vpop.f32.mrb[0].mxu0
        %474 = vmatprep.mubr.f32.mxu0 0.0
        %475 = vmatmul.mubr.f32.gmra.mrb[0].mxu0 %v350
        %v476 = vpop.f32.mrb[0].mxu0
        %v477 = vadd.f32 0.0, %v476
        %v478 = vpop.f32.mrb[0].mxu0
        %479 = vmatprep.mubr.f32.mxu0 0.0
        %480 = vmatmul.mubr.f32.gmra.mrb[0].mxu0 %v351
        %v481 = vpop.f32.mrb[0].mxu0
        %v482 = vadd.f32 0.0, %v481
        %v483 = vpop.f32.mrb[0].mxu0
        %484 = vmatprep.mubr.f32.mxu0 0.0
        %485 = vmatmul.mubr.f32.gmra.mrb[0].mxu0 %v352
        %v486 = vpop.f32.mrb[0].mxu0
        %v487 = vadd.f32 0.0, %v486
        %v488 = vpop.f32.mrb[0].mxu0
        %489 = vmatprep.mubr.f32.mxu0 0.0
        %490 = vmatmul.mubr.f32.gmra.mrb[0].mxu0 %v353
        %v491 = vpop.f32.mrb[0].mxu0
        %v492 = vadd.f32 0.0, %v491
        %v493 = vpop.f32.mrb[0].mxu0
        %494 = vmatprep.mubr.f32.mxu0 0.0
        %495 = vmatmul.mubr.f32.gmra.mrb[0].mxu0 %v354
        %v496 = vpop.f32.mrb[0].mxu0
        %v497 = vadd.f32 0.0, %v496
        %v498 = vpop.f32.mrb[0].mxu0
        %499 = vmatprep.mubr.f32.mxu0 0.0
        %500 = vmatmul.mubr.f32.gmra.mrb[0].mxu0 %v355
        %v501 = vpop.f32.mrb[0].mxu0
        %v502 = vadd.f32 0.0, %v501
        %v503 = vpop.f32.mrb[0].mxu0
        %504 = vmatprep.mubr.f32.mxu0 0.0
        %505 = vmatmul.mubr.f32.gmra.mrb[0].mxu0 %v356
        %v506 = vpop.f32.mrb[0].mxu0
        %v507 = vadd.f32 0.0, %v506
        %v508 = vpop.f32.mrb[0].mxu0
        %509 = vmatprep.mubr.f32.mxu0 0.0
        %510 = vmatmul.mubr.f32.gmra.mrb[0].mxu0 %v357
        %v511 = vpop.f32.mrb[0].mxu0
        %v512 = vadd.f32 0.0, %v511
        %v513 = vpop.f32.mrb[0].mxu0
        %514 = vmatprep.mubr.f32.mxu0 0.0
        %515 = vmatmul.mubr.f32.gmra.mrb[0].mxu0 %v358
        %v516 = vpop.f32.mrb[0].mxu0
        %v517 = vadd.f32 0.0, %v516
        %v518 = vpop.f32.mrb[0].mxu0
        %519 = vdwg.mxu0
        %v520 = vadd.f32 %v327, %v442
        %v521 = vadd.f32 %v328, %v447
        %v522 = vadd.f32 %v329, %v452
        %v523 = vadd.f32 %v330, %v457
        %v524 = vadd.f32 %v331, %v462
        %v525 = vadd.f32 %v332, %v467
        %v526 = vadd.f32 %v333, %v472
        %v527 = vadd.f32 %v334, %v477
        %v528 = vadd.f32 %v335, %v482
        %v529 = vadd.f32 %v336, %v487
        %v530 = vadd.f32 %v337, %v492
        %v531 = vadd.f32 %v338, %v497
        %v532 = vadd.f32 %v339, %v502
        %v533 = vadd.f32 %v340, %v507
        %v534 = vadd.f32 %v341, %v512
        %v535 = vadd.f32 %v342, %v517
        %536 = vst [vmem:[#allocation2] sm:$0xff] %v520
        %537 = vst [vmem:[#allocation2 + $0x8] sm:$0xff] %v521
        %538 = vst [vmem:[#allocation2 + $0x10] sm:$0xff] %v522
        %539 = vst [vmem:[#allocation2 + $0x18] sm:$0xff] %v523
        %540 = vst [vmem:[#allocation2 + $0x20] sm:$0xff] %v524
        %541 = vst [vmem:[#allocation2 + $0x28] sm:$0xff] %v525
        %542 = vst [vmem:[#allocation2 + $0x30] sm:$0xff] %v526
        %543 = vst [vmem:[#allocation2 + $0x38] sm:$0xff] %v527
        %544 = vst [vmem:[#allocation2 + $0x40] sm:$0xff] %v528
        %545 = vst [vmem:[#allocation2 + $0x48] sm:$0xff] %v529
        %546 = vst [vmem:[#allocation2 + $0x50] sm:$0xff] %v530
        %547 = vst [vmem:[#allocation2 + $0x58] sm:$0xff] %v531
        %548 = vst [vmem:[#allocation2 + $0x60] sm:$0xff] %v532
        %549 = vst [vmem:[#allocation2 + $0x68] sm:$0xff] %v533
        %550 = vst [vmem:[#allocation2 + $0x70] sm:$0xff] %v534
        %551 = vst [vmem:[#allocation2 + $0x78] sm:$0xff] %v535
        // Predicated region
        $region53: #{tpu_custom_call.1} parent=35 // pred_check
          %p552 = pneg %p307
        $region54: #{tpu_custom_call.1} parent=35 // pred_check_branch
          %554 = sbr.rel (%p552) target = $region56
        $region55: #{tpu_custom_call.1} parent=35 // pred_region
          %v555 = vld [vmem:[#allocation2] sm:$0xff]
          %v556 = vld [vmem:[#allocation2 + $0x8] sm:$0xff]
          %v557 = vld [vmem:[#allocation2 + $0x10] sm:$0xff]
          %v558 = vld [vmem:[#allocation2 + $0x18] sm:$0xff]
          %v559 = vld [vmem:[#allocation2 + $0x20] sm:$0xff]
          %v560 = vld [vmem:[#allocation2 + $0x28] sm:$0xff]
          %v561 = vld [vmem:[#allocation2 + $0x30] sm:$0xff]
          %v562 = vld [vmem:[#allocation2 + $0x38] sm:$0xff]
          %v563 = vld [vmem:[#allocation2 + $0x40] sm:$0xff]
          %v564 = vld [vmem:[#allocation2 + $0x48] sm:$0xff]
          %v565 = vld [vmem:[#allocation2 + $0x50] sm:$0xff]
          %v566 = vld [vmem:[#allocation2 + $0x58] sm:$0xff]
          %v567 = vld [vmem:[#allocation2 + $0x60] sm:$0xff]
          %v568 = vld [vmem:[#allocation2 + $0x68] sm:$0xff]
          %v569 = vld [vmem:[#allocation2 + $0x70] sm:$0xff]
          %v570 = vld [vmem:[#allocation2 + $0x78] sm:$0xff]
          %v571 = vld [vmem:[#allocation10] sm:$0xff]
          %v572 = vld [vmem:[#allocation10 + $0x8] sm:$0xff]
          %v573 = vld [vmem:[#allocation10 + $0x10] sm:$0xff]
          %v574 = vld [vmem:[#allocation10 + $0x18] sm:$0xff]
          %v575 = vld [vmem:[#allocation10 + $0x20] sm:$0xff]
          %v576 = vld [vmem:[#allocation10 + $0x28] sm:$0xff]
          %v577 = vld [vmem:[#allocation10 + $0x30] sm:$0xff]
          %v578 = vld [vmem:[#allocation10 + $0x38] sm:$0xff]
          %v579 = vld [vmem:[#allocation10 + $0x40] sm:$0xff]
          %v580 = vld [vmem:[#allocation10 + $0x48] sm:$0xff]
          %v581 = vld [vmem:[#allocation10 + $0x50] sm:$0xff]
          %v582 = vld [vmem:[#allocation10 + $0x58] sm:$0xff]
          %v583 = vld [vmem:[#allocation10 + $0x60] sm:$0xff]
          %v584 = vld [vmem:[#allocation10 + $0x68] sm:$0xff]
          %v585 = vld [vmem:[#allocation10 + $0x70] sm:$0xff]
          %v586 = vld [vmem:[#allocation10 + $0x78] sm:$0xff]
          %v587 = vld [vmem:[%s4] sm:$0x1]
          %v589 = vlaneseq
          %v590 = vshrl.u32 %v589, 7
          %v591 = vsub.s32 0, %v590
          %v592 = vrot.slane %v587, %v591
          %594 = vmatprep.subr.mxu0 0.0
          %595 = vmatpush1.msra.mxu0 %v571
          %596 = vmatprep.subr.mxu0 0.0
          %597 = vmatpush1.msra.mxu0 %v572
          %598 = vmatprep.subr.mxu0 0.0
          %599 = vmatpush1.msra.mxu0 %v573
          %600 = vmatprep.subr.mxu0 0.0
          %601 = vmatpush1.msra.mxu0 %v574
          %602 = vmatprep.subr.mxu0 0.0
          %603 = vmatpush1.msra.mxu0 %v575
          %604 = vmatprep.subr.mxu0 0.0
          %605 = vmatpush1.msra.mxu0 %v576
          %606 = vmatprep.subr.mxu0 0.0
          %607 = vmatpush1.msra.mxu0 %v577
          %608 = vmatprep.subr.mxu0 0.0
          %609 = vmatpush1.msra.mxu0 %v578
          %610 = vmatprep.subr.mxu0 0.0
          %611 = vmatpush1.msra.mxu0 %v579
          %612 = vmatprep.subr.mxu0 0.0
          %613 = vmatpush1.msra.mxu0 %v580
          %614 = vmatprep.subr.mxu0 0.0
          %615 = vmatpush1.msra.mxu0 %v581
          %616 = vmatprep.subr.mxu0 0.0
          %617 = vmatpush1.msra.mxu0 %v582
          %618 = vmatprep.subr.mxu0 0.0
          %619 = vmatpush1.msra.mxu0 %v583
          %620 = vmatprep.subr.mxu0 0.0
          %621 = vmatpush1.msra.mxu0 %v584
          %622 = vmatprep.subr.mxu0 0.0
          %623 = vmatpush1.msra.mxu0 %v585
          %624 = vmatprep.subr.mxu0 0.0
          %625 = vmatpush1.msra.mxu0 %v586
          %626 = vmatprep.subr.mxu0 0.0
          %627 = vmatpush1.msra.mxu0 0.0
          %628 = vmatprep.subr.mxu0 0.0
          %629 = vmatpush1.msra.mxu0 0.0
          %630 = vmatprep.subr.mxu0 0.0
          %631 = vmatpush1.msra.mxu0 0.0
          %632 = vmatprep.subr.mxu0 0.0
          %633 = vmatpush1.msra.mxu0 0.0
          %634 = vmatprep.subr.mxu0 0.0
          %635 = vmatpush1.msra.mxu0 0.0
          %636 = vmatprep.subr.mxu0 0.0
          %637 = vmatpush1.msra.mxu0 0.0
          %638 = vmatprep.subr.mxu0 0.0
          %639 = vmatpush1.msra.mxu0 0.0
          %640 = vmatprep.subr.mxu0 0.0
          %641 = vmatpush1.msra.mxu0 0.0
          %642 = vmatprep.subr.mxu0 0.0
          %643 = vmatpush1.msra.mxu0 0.0
          %644 = vmatprep.subr.mxu0 0.0
          %645 = vmatpush1.msra.mxu0 0.0
          %646 = vmatprep.subr.mxu0 0.0
          %647 = vmatpush1.msra.mxu0 0.0
          %648 = vmatprep.subr.mxu0 0.0
          %649 = vmatpush1.msra.mxu0 0.0
          %650 = vmatprep.subr.mxu0 0.0
          %651 = vmatpush1.msra.mxu0 0.0
          %652 = vmatprep.subr.mxu0 0.0
          %653 = vmatpush1.msra.mxu0 0.0
          %654 = vmatprep.subr.mxu0 0.0
          %655 = vmatpush1.msra.mxu0 0.0
          %656 = vmatprep.subr.mxu0 0.0
          %657 = vmatpush1.msra.mxu0 0.0
          %658 = vmatprep.mubr.f32.mxu0 0.0
          %659 = vmatmul.mubr.f32.gmra.mrb[0].mxu0 %v555
          %v660 = vpop.f32.mrb[0].mxu0
          %v661 = vadd.f32 %v592, %v660
          %v662 = vpop.f32.mrb[0].mxu0
          %663 = vmatprep.mubr.f32.mxu0 0.0
          %664 = vmatmul.mubr.f32.gmra.mrb[0].mxu0 %v556
          %v665 = vpop.f32.mrb[0].mxu0
          %v666 = vadd.f32 %v592, %v665
          %v667 = vpop.f32.mrb[0].mxu0
          %668 = vmatprep.mubr.f32.mxu0 0.0
          %669 = vmatmul.mubr.f32.gmra.mrb[0].mxu0 %v557
          %v670 = vpop.f32.mrb[0].mxu0
          %v671 = vadd.f32 %v592, %v670
          %v672 = vpop.f32.mrb[0].mxu0
          %673 = vmatprep.mubr.f32.mxu0 0.0
          %674 = vmatmul.mubr.f32.gmra.mrb[0].mxu0 %v558
          %v675 = vpop.f32.mrb[0].mxu0
          %v676 = vadd.f32 %v592, %v675
          %v677 = vpop.f32.mrb[0].mxu0
          %678 = vmatprep.mubr.f32.mxu0 0.0
          %679 = vmatmul.mubr.f32.gmra.mrb[0].mxu0 %v559
          %v680 = vpop.f32.mrb[0].mxu0
          %v681 = vadd.f32 %v592, %v680
          %v682 = vpop.f32.mrb[0].mxu0
          %683 = vmatprep.mubr.f32.mxu0 0.0
          %684 = vmatmul.mubr.f32.gmra.mrb[0].mxu0 %v560
          %v685 = vpop.f32.mrb[0].mxu0
          %v686 = vadd.f32 %v592, %v685
          %v687 = vpop.f32.mrb[0].mxu0
          %688 = vmatprep.mubr.f32.mxu0 0.0
          %689 = vmatmul.mubr.f32.gmra.mrb[0].mxu0 %v561
          %v690 = vpop.f32.mrb[0].mxu0
          %v691 = vadd.f32 %v592, %v690
          %v692 = vpop.f32.mrb[0].mxu0
          %693 = vmatprep.mubr.f32.mxu0 0.0
          %694 = vmatmul.mubr.f32.gmra.mrb[0].mxu0 %v562
          %v695 = vpop.f32.mrb[0].mxu0
          %v696 = vadd.f32 %v592, %v695
          %v697 = vpop.f32.mrb[0].mxu0
          %698 = vmatprep.mubr.f32.mxu0 0.0
          %699 = vmatmul.mubr.f32.gmra.mrb[0].mxu0 %v563
          %v700 = vpop.f32.mrb[0].mxu0
          %v701 = vadd.f32 %v592, %v700
          %v702 = vpop.f32.mrb[0].mxu0
          %703 = vmatprep.mubr.f32.mxu0 0.0
          %704 = vmatmul.mubr.f32.gmra.mrb[0].mxu0 %v564
          %v705 = vpop.f32.mrb[0].mxu0
          %v706 = vadd.f32 %v592, %v705
          %v707 = vpop.f32.mrb[0].mxu0
          %708 = vmatprep.mubr.f32.mxu0 0.0
          %709 = vmatmul.mubr.f32.gmra.mrb[0].mxu0 %v565
          %v710 = vpop.f32.mrb[0].mxu0
          %v711 = vadd.f32 %v592, %v710
          %v712 = vpop.f32.mrb[0].mxu0
          %713 = vmatprep.mubr.f32.mxu0 0.0
          %714 = vmatmul.mubr.f32.gmra.mrb[0].mxu0 %v566
          %v715 = vpop.f32.mrb[0].mxu0
          %v716 = vadd.f32 %v592, %v715
          %v717 = vpop.f32.mrb[0].mxu0
          %718 = vmatprep.mubr.f32.mxu0 0.0
          %719 = vmatmul.mubr.f32.gmra.mrb[0].mxu0 %v567
          %v720 = vpop.f32.mrb[0].mxu0
          %v721 = vadd.f32 %v592, %v720
          %v722 = vpop.f32.mrb[0].mxu0
          %723 = vmatprep.mubr.f32.mxu0 0.0
          %724 = vmatmul.mubr.f32.gmra.mrb[0].mxu0 %v568
          %v725 = vpop.f32.mrb[0].mxu0
          %v726 = vadd.f32 %v592, %v725
          %v727 = vpop.f32.mrb[0].mxu0
          %728 = vmatprep.mubr.f32.mxu0 0.0
          %729 = vmatmul.mubr.f32.gmra.mrb[0].mxu0 %v569
          %v730 = vpop.f32.mrb[0].mxu0
          %v731 = vadd.f32 %v592, %v730
          %v732 = vpop.f32.mrb[0].mxu0
          %733 = vmatprep.mubr.f32.mxu0 0.0
          %734 = vmatmul.mubr.f32.gmra.mrb[0].mxu0 %v570
          %v735 = vpop.f32.mrb[0].mxu0
          %v736 = vadd.f32 %v592, %v735
          %v737 = vpop.f32.mrb[0].mxu0
          %738 = vdwg.mxu0
          %s739 = sld [smem:[#allocation4]]
          %vm740 = vcmp.gt.f32.partialorder %v661, 0.0
          %vm741 = vcmp.gt.f32.partialorder %v666, 0.0
          %vm742 = vcmp.gt.f32.partialorder %v671, 0.0
          %vm743 = vcmp.gt.f32.partialorder %v676, 0.0
          %vm744 = vcmp.gt.f32.partialorder %v681, 0.0
          %vm745 = vcmp.gt.f32.partialorder %v686, 0.0
          %vm746 = vcmp.gt.f32.partialorder %v691, 0.0
          %vm747 = vcmp.gt.f32.partialorder %v696, 0.0
          %vm748 = vcmp.gt.f32.partialorder %v701, 0.0
          %vm749 = vcmp.gt.f32.partialorder %v706, 0.0
          %vm750 = vcmp.gt.f32.partialorder %v711, 0.0
          %vm751 = vcmp.gt.f32.partialorder %v716, 0.0
          %vm752 = vcmp.gt.f32.partialorder %v721, 0.0
          %vm753 = vcmp.gt.f32.partialorder %v726, 0.0
          %vm754 = vcmp.gt.f32.partialorder %v731, 0.0
          %vm755 = vcmp.gt.f32.partialorder %v736, 0.0
          %v756 = vstv %s739
          %v757 = vmul.f32 %v756, %v661
          %v758 = vmul.f32 %v756, %v666
          %v759 = vmul.f32 %v756, %v671
          %v760 = vmul.f32 %v756, %v676
          %v761 = vmul.f32 %v756, %v681
          %v762 = vmul.f32 %v756, %v686
          %v763 = vmul.f32 %v756, %v691
          %v764 = vmul.f32 %v756, %v696
          %v765 = vmul.f32 %v756, %v701
          %v766 = vmul.f32 %v756, %v706
          %v767 = vmul.f32 %v756, %v711
          %v768 = vmul.f32 %v756, %v716
          %v769 = vmul.f32 %v756, %v721
          %v770 = vmul.f32 %v756, %v726
          %v771 = vmul.f32 %v756, %v731
          %v772 = vmul.f32 %v756, %v736
          %v773 = vsel %vm740, %v661, %v757
          %v774 = vsel %vm741, %v666, %v758
          %v775 = vsel %vm742, %v671, %v759
          %v776 = vsel %vm743, %v676, %v760
          %v777 = vsel %vm744, %v681, %v761
          %v778 = vsel %vm745, %v686, %v762
          %v779 = vsel %vm746, %v691, %v763
          %v780 = vsel %vm747, %v696, %v764
          %v781 = vsel %vm748, %v701, %v765
          %v782 = vsel %vm749, %v706, %v766
          %v783 = vsel %vm750, %v711, %v767
          %v784 = vsel %vm751, %v716, %v768
          %v785 = vsel %vm752, %v721, %v769
          %v786 = vsel %vm753, %v726, %v770
          %v787 = vsel %vm754, %v731, %v771
          %v788 = vsel %vm755, %v736, %v772
          %789 = vst [vmem:[%s303] sm:$0xff] %v773
          %790 = vst [vmem:[%s303 + $0x8] sm:$0xff] %v774
          %791 = vst [vmem:[%s303 + $0x10] sm:$0xff] %v775
          %792 = vst [vmem:[%s303 + $0x18] sm:$0xff] %v776
          %793 = vst [vmem:[%s303 + $0x20] sm:$0xff] %v777
          %794 = vst [vmem:[%s303 + $0x28] sm:$0xff] %v778
          %795 = vst [vmem:[%s303 + $0x30] sm:$0xff] %v779
          %796 = vst [vmem:[%s303 + $0x38] sm:$0xff] %v780
          %797 = vst [vmem:[%s303 + $0x40] sm:$0xff] %v781
          %798 = vst [vmem:[%s303 + $0x48] sm:$0xff] %v782
          %799 = vst [vmem:[%s303 + $0x50] sm:$0xff] %v783
          %800 = vst [vmem:[%s303 + $0x58] sm:$0xff] %v784
          %801 = vst [vmem:[%s303 + $0x60] sm:$0xff] %v785
          %802 = vst [vmem:[%s303 + $0x68] sm:$0xff] %v786
          %803 = vst [vmem:[%s303 + $0x70] sm:$0xff] %v787
          %804 = vst [vmem:[%s303 + $0x78] sm:$0xff] %v788
        $region56: #{tpu_custom_call.1} parent=35 // pred_fallthru
          _
        %s805 = sand.u32 %s155, 1
        %s806 = scalar_lea.sflag [#allocation7], %s805
        %s807 = sand.u32 %s155, 1
        %s808 = smul.addr %s807, 128
        %s809 = scalar_lea.vmem [#allocation11], %s808
        // Predicated region
        $region57: #{tpu_custom_call.1} parent=35 // pred_check
          %p810 = pneg %p165
        $region58: #{tpu_custom_call.1} parent=35 // pred_check_branch
          %812 = sbr.rel (%p810) target = $region60
        $region59: #{tpu_custom_call.1} parent=35 // pred_region
          %s813 = smul.u32 16, %s32
          %s815 = ssub.s32 2048, 2048
          %816 = vsyncadd %s806, %s815
          %s817 = smul.addr %s31, 16
          %s818 = sadd.s32 %s813, %s817
          %s819 = smul.addr %s818, 128
          %s820 = scalar_lea.hbm %s5, %s819
          %s821 = sshll.u32 %s809, 4
          %s822 = int_to_ptr.vmem [resolvable:$true] %s821
          %827 = dma.vmem_to_hbm [thread:$0]  %s822, 2048, %s820, %s806, 128, 128, 8
        $region60: #{tpu_custom_call.1} parent=35 // pred_fallthru
          _
      $region36: #{tpu_custom_call.1} parent=5 // pred_fallthru
        _
      %p828 = scmp.le.s32.totalorder 2, %s21
      // Predicated region
      $region61: #{tpu_custom_call.1} parent=5 // pred_check
        %p829 = pneg %p828
      $region62: #{tpu_custom_call.1} parent=5 // pred_check_branch
        %831 = sbr.rel (%p829) target = $region64
      $region63: #{tpu_custom_call.1} parent=5 // pred_region
        %s832 = ssub.s32 %s21, 2
        // Predicated region
        $region65: #{tpu_custom_call.1} parent=63 // pred_check
          %p833 = pneg %p171
        $region66: #{tpu_custom_call.1} parent=63 // pred_check_branch
          %835 = sbr.rel (%p833) target = $region68
        $region67: #{tpu_custom_call.1} parent=63 // pred_region
          %s836 = sand.u32 %s156, 1
          %s837 = scalar_lea.sflag [#allocation7], %s836
          %s838 = sand.u32 %s156, 1
          %s839 = smul.addr %s838, 128
          %s840 = scalar_lea.vmem [#allocation11], %s839
          %841 = dma.done %s837, 2048
        $region68: #{tpu_custom_call.1} parent=63 // pred_fallthru
          _
      $region64: #{tpu_custom_call.1} parent=5 // pred_fallthru
        _
    $region6: #{tpu_custom_call.1} parent=1 // loop_footer
      %s25 = sadd.s32 1, %s21
    $region7: #{tpu_custom_call.1} parent=1 // loop_footer_branch
      %20 = sbr.rel target = $region3
    $region8: #{tpu_custom_call.1} parent=1 // loop_exit
      _
    %842 = vsyncpa [#allocation6], 1
    %s843 = scalar_lea.sflag [#allocation6], 1
    %844 = vsyncpa %s843, 1
    %845 = vsyncpa [#allocation9], 1
    %s846 = scalar_lea.sflag [#allocation9], 1
    %847 = vsyncpa %s846, 1
    %848 = vsyncpa [#allocation7], 1
    %s849 = scalar_lea.sflag [#allocation7], 1
    %850 = vsyncpa %s849, 1

</llo_original>
